<compile_context>
chip_gen: v7x
topology: tpu7x:2x2x1
jax: 0.10.0
libtpu: 0.0.40
codegen_flags: <defaults>
</compile_context>

<pallas_src>
import functools

import jax
import jax.numpy as jnp
from jax.experimental import pallas as pl
from jax.experimental.pallas import tpu as pltpu

EPS = 1e-5  # nn.BatchNorm1d default eps


def _round_up(n, m):
    return (n + m - 1) // m * m


def _vmem_cap_bytes():
    """Device VMEM capacity (with headroom); conservative fallback fits v7x."""
    try:
        return int(pltpu.get_tpu_info().vmem_capacity_bytes * 0.85)
    except Exception:
        return 48 * 2 ** 20


def _bn_relu_tile(y, gamma, beta, inv_b, b_real, mask_rows):
    """BatchNorm1d (training batch stats) + ReLU on one [Bp, tn] f32 tile.

    Padded batch rows of y are exactly zero so the one-pass sums stay exact
    after dividing by the real batch size.
    """
    s = jnp.sum(y, axis=0, keepdims=True)
    sq = jnp.sum(y * y, axis=0, keepdims=True)
    mean = s * inv_b
    var = sq * inv_b - mean * mean  # biased (training-mode) variance
    # NOTE: one-pass E[y^2]-E[y]^2 can lose precision if |mean| >> std; fine here.

    # Fold the BN affine into a single per-feature scale/bias (2 VPU passes).
    a = gamma * jax.lax.rsqrt(var + EPS)
    c = beta - mean * a
    h = jnp.maximum(y * a + c, 0.0)

    if mask_rows:
        # Re-zero padded batch rows (the affine shift made them nonzero) so the
        # next layer's statistics stay exact.  [Bp, 1] iota, not a full tile.
        row = jax.lax.broadcasted_iota(jnp.int32, (y.shape[0], 1), 0)
        h = jnp.where(row < b_real, h, 0.0)
    return h


def _resblock_kernel(x_ref, w_ref, g_ref, b_ref, o_ref, h_ref, *, b_real):
    """Grid = (layer, feature-tile).  x resident; w/gamma/beta tiled per step."""
    layer = pl.program_id(0)
    j = pl.program_id(1)
    tn = w_ref.shape[-1]
    bp = x_ref.shape[0]
    inv_b = jnp.float32(1.0 / b_real)
    col0 = pl.multiple_of(j * tn, 128)

    gamma = g_ref[...].astype(jnp.float32)  # [1, tn]
    beta = b_ref[...].astype(jnp.float32)   # [1, tn]

    @pl.when(layer == 0)
    def _layer1():
        # [Bp, Fp] @ [Fp, tn] plain NN contraction, f32 accumulation on the MXU.
        y = jax.lax.dot_general(
            x_ref[...], w_ref[...],
            dimension_numbers=(((1,), (0,)), ((), ())),
            preferred_element_type=jnp.float32)
        h = _bn_relu_tile(y, gamma, beta, inv_b, b_real, mask_rows=(bp != b_real))
        h_ref[:, pl.ds(col0, tn)] = h.astype(h_ref.dtype)

    @pl.when(layer == 1)
    def _layer2_plus_residual():
        y = jax.lax.dot_general(
            h_ref[...], w_ref[...],
            dimension_numbers=(((1,), (0,)), ((), ())),
            preferred_element_type=jnp.float32)
        h = _bn_relu_tile(y, gamma, beta, inv_b, b_real, mask_rows=False)
        resid = x_ref[:, pl.ds(col0, tn)].astype(jnp.float32)
        o_ref[...] = (h + resid).astype(o_ref.dtype)


def prepare_params(w1, g1, b1, w2, g2, b2, compute_dtype=jnp.bfloat16):
    """One-time parameter preprocessing (hoisted out of the per-call path).

    Weights arrive in PyTorch (out, in) layout; they are transposed to (in, out),
    zero-padded to a multiple of 128 features, cast to compute_dtype and stacked.
    compute_dtype=jnp.bfloat16 (default) halves weight HBM traffic and uses the
    native bf16 MXU path (with f32 accumulation) -- a deliberate precision trade;
    pass jnp.float32 to reproduce exact PyTorch f32 numerics.
    """
    F = w1.shape[0]
    assert w1.shape == (F, F) and w2.shape == (F, F)
    Fp = _round_up(F, 128)
    pf = Fp - F
    cdtype = jnp.dtype(compute_dtype)

    def prep_w(w):
        return jnp.pad(w.T.astype(cdtype), ((0, pf), (0, pf)))  # [in, out]

    w = jnp.stack([prep_w(w1), prep_w(w2)])                      # [2, Fp, Fp]
    g = jnp.stack([jnp.pad(g1.astype(jnp.float32), (0, pf)),
                   jnp.pad(g2.astype(jnp.float32), (0, pf))]).reshape(2, 1, Fp)
    b = jnp.stack([jnp.pad(b1.astype(jnp.float32), (0, pf)),
                   jnp.pad(b2.astype(jnp.float32), (0, pf))]).reshape(2, 1, Fp)
    return {"w": w, "gamma": g, "beta": b,
            "n_features": F, "compute_dtype": cdtype}


def resblock_linear(x, params, tile_n=None):
    """x: [B, F]; params: output of prepare_params().  Returns [B, F]."""
    B, F = x.shape
    assert F == params["n_features"]
    w, gamma, beta = params["w"], params["gamma"], params["beta"]
    cdtype = params["compute_dtype"]
    Fp = w.shape[-1]
    Bp = _round_up(B, 8)
    out_dtype = x.dtype

    if tile_n is None:
        tile_n = Fp if Fp <= 512 else (
            512 if Fp % 512 == 0 else 256 if Fp % 256 == 0 else 128)
    assert Fp % tile_n == 0 and tile_n % 128 == 0
    n_tiles = Fp // tile_n

    # Padding / casting the activations (zero padding keeps the math exact; padded
    # feature columns stay zero through matmul/BN/ReLU, padded batch rows are
    # handled in-kernel).
    fresh = (Bp != B) or (Fp != F) or (jnp.dtype(x.dtype) != cdtype)
    xp = jnp.pad(x, ((0, Bp - B), (0, Fp - F))).astype(cdtype)

    cb = cdtype.itemsize
    ob = jnp.dtype(out_dtype).itemsize
    vmem_est = (Bp * Fp * cb                # resident x
                + Bp * Fp * cb              # h scratch
                + 2 * Fp * tile_n * cb      # double-buffered weight tiles
                + 2 * Bp * tile_n * ob      # double-buffered output tiles
                + 8 * tile_n * 4            # gamma / beta tiles
                + 4 * Bp * tile_n * 4)      # f32 intermediates headroom
    vmem_limit = int(max(4 * 2 ** 20,
                         min(_vmem_cap_bytes(), int(vmem_est * 1.5) + (2 << 20))))

    alias = {0: 0} if (fresh and jnp.dtype(out_dtype) == cdtype) else {}

    out = pl.pallas_call(
        functools.partial(_resblock_kernel, b_real=B),
        out_shape=jax.ShapeDtypeStruct((Bp, Fp), out_dtype),
        grid=(2, n_tiles),
        in_specs=[
            pl.BlockSpec((Bp, Fp), lambda l, j: (0, 0)),               # x (resident)
            pl.BlockSpec((None, Fp, tile_n), lambda l, j: (l, 0, j)),  # weight tile
            pl.BlockSpec((None, 1, tile_n), lambda l, j: (l, 0, j)),   # gamma tile
            pl.BlockSpec((None, 1, tile_n), lambda l, j: (l, 0, j)),   # beta tile
        ],
        out_specs=pl.BlockSpec((Bp, tile_n), lambda l, j: (0, j)),
        scratch_shapes=[pltpu.VMEM((Bp, Fp), cdtype)],                 # layer-1 acts
        input_output_aliases=alias,
        compiler_params=pltpu.CompilerParams(
            dimension_semantics=("arbitrary", "arbitrary"),
            vmem_limit_bytes=vmem_limit),
    )(xp, w, gamma, beta)
    return out[:B, :F]


def _reference(x, w1, g1, b1, w2, g2, b2):
    """Pure-JAX reference mirroring the PyTorch training-mode forward."""
    def layer(h, w, gamma, beta):
        y = h @ w.T
        mean = jnp.mean(y, axis=0, keepdims=True)
        var = jnp.mean((y - mean) ** 2, axis=0, keepdims=True)
        return jnp.maximum((y - mean) / jnp.sqrt(var + EPS) * gamma + beta, 0.0)
    return layer(layer(x, w1, g1, b1), w2, g2, b2) + x


def _make_case(key, B, F, trivial_affine):
    ks = jax.random.split(key, 7)
    x = jax.random.normal(ks[0], (B, F), dtype=jnp.float32)
    bound = 1.0 / (F ** 0.5)
    w1 = jax.random.uniform(ks[1], (F, F), jnp.float32, -bound, bound)  # (out, in)
    w2 = jax.random.uniform(ks[2], (F, F), jnp.float32, -bound, bound)
    if trivial_affine:
        g1 = jnp.ones((F,), jnp.float32); b1 = jnp.zeros((F,), jnp.float32)
        g2 = jnp.ones((F,), jnp.float32); b2 = jnp.zeros((F,), jnp.float32)
    else:
        g1 = 1.0 + 0.1 * jax.random.normal(ks[3], (F,), jnp.float32)
        b1 = 0.1 * jax.random.normal(ks[4], (F,), jnp.float32)
        g2 = 1.0 + 0.1 * jax.random.normal(ks[5], (F,), jnp.float32)
        b2 = 0.1 * jax.random.normal(ks[6], (F,), jnp.float32)
    return x, w1, g1, b1, w2, g2, b2


def _check_case(name, key, B, F, trivial_affine, tile_n=None,
                f32_tol=1e-4, bf16_tol=1e-1):
    x, w1, g1, b1, w2, g2, b2 = _make_case(key, B, F, trivial_affine)
    ref = _reference(x, w1, g1, b1, w2, g2, b2)

    # Exact f32 path (matches PyTorch f32 numerics).
    p32 = prepare_params(w1, g1, b1, w2, g2, b2, compute_dtype=jnp.float32)
    out32 = jax.block_until_ready(resblock_linear(x, p32, tile_n=tile_n))
    assert out32.shape == (B, F)
    assert jnp.allclose(out32, ref, atol=f32_tol, rtol=f32_tol), \
        f"f32 mismatch vs reference ({name})"

    # Fast bf16 path (halved weight HBM traffic, native bf16 MXU, f32 accumulation).
    pbf = prepare_params(w1, g1, b1, w2, g2, b2)  # default bf16
    outbf = jax.block_until_ready(resblock_linear(x, pbf, tile_n=tile_n))
    assert outbf.shape == (B, F)
    assert jnp.allclose(outbf, ref, atol=bf16_tol, rtol=bf16_tol), \
        f"bf16 mismatch vs reference ({name})"


if __name__ == "__main__":
    root = jax.random.PRNGKey(0)
    k1, k2, k3 = jax.random.split(root, 3)

    # Case 1: small, PyTorch-default BN affine params.
    _check_case("case1", k1, B=8, F=32, trivial_affine=True)

    # Case 2: non-aligned batch/feature sizes -> exercises padding + row masking.
    _check_case("case2", k2, B=6, F=40, trivial_affine=False)

    # Case 3: multi-tile grid (Fp=256, tile_n=128) -> exercises weight streaming.
    _check_case("case3", k3, B=16, F=256, trivial_affine=False,
                tile_n=128, f32_tol=1e-3)

    print("KERNEL_OK")
</pallas_src>

<mosaic_0001>
module attributes {stable_mosaic.version = 11 : i64} {
  func.func @_resblock_kernel(%arg0: i32, %arg1: i32, %arg2: memref<8x128xf32, #tpu.memory_space<vmem>>, %arg3: memref<1x128x128xf32, #tpu.memory_space<vmem>>, %arg4: memref<1x1x128xf32, #tpu.memory_space<vmem>>, %arg5: memref<1x1x128xf32, #tpu.memory_space<vmem>>, %arg6: memref<8x128xf32, #tpu.memory_space<vmem>>, %arg7: memref<8x128xf32, #tpu.memory_space<vmem>>) attributes {dimension_semantics = [#tpu.dimension_semantics<arbitrary>, #tpu.dimension_semantics<arbitrary>], iteration_bounds = array<i64: 2, 1>, scalar_prefetch = 0 : i64, scratch_operands = 1 : i64, tpu.core_type = #tpu.core_type<tc>, window_params = [{pipeline_mode = #tpu.pipeline_mode<synchronous>, transform_indices = @transform_0, window_bounds = array<i64: 8, 128>}, {transform_indices = @transform_1, window_bounds = array<i64: 1, 128, 128>}, {transform_indices = @transform_2, window_bounds = array<i64: 1, 1, 128>}, {transform_indices = @transform_3, window_bounds = array<i64: 1, 1, 128>}, {transform_indices = @transform_4, window_bounds = array<i64: 8, 128>}]} {
    %c128_i32 = arith.constant 128 : i32
    %0 = arith.muli %arg1, %c128_i32 : i32
    %1 = tpu.assume_multiple %0, 128 : i32
    %c0 = arith.constant 0 : index
    %c0_0 = arith.constant 0 : index
    %c0_1 = arith.constant 0 : index
    %2 = vector.load %arg4[%c0, %c0_0, %c0_1] : memref<1x1x128xf32, #tpu.memory_space<vmem>>, vector<1x1x128xf32>
    %3 = vector.shape_cast %2 : vector<1x1x128xf32> to vector<1x128xf32>
    %c0_2 = arith.constant 0 : index
    %c0_3 = arith.constant 0 : index
    %c0_4 = arith.constant 0 : index
    %4 = vector.load %arg5[%c0_2, %c0_3, %c0_4] : memref<1x1x128xf32, #tpu.memory_space<vmem>>, vector<1x1x128xf32>
    %5 = vector.shape_cast %4 : vector<1x1x128xf32> to vector<1x128xf32>
    %c0_i32 = arith.constant 0 : i32
    %6 = arith.cmpi eq, %arg0, %c0_i32 : i32
    %7 = arith.extui %6 : i1 to i32
    %cst = arith.constant 1.250000e-01 : f32
    %c0_i32_5 = arith.constant 0 : i32
    %8 = arith.cmpi ne, %7, %c0_i32_5 : i32
    scf.if %8 {
      %c0_8 = arith.constant 0 : index
      %c0_9 = arith.constant 0 : index
      %12 = vector.load %arg2[%c0_8, %c0_9] : memref<8x128xf32, #tpu.memory_space<vmem>>, vector<8x128xf32>
      %c0_10 = arith.constant 0 : index
      %c0_11 = arith.constant 0 : index
      %c0_12 = arith.constant 0 : index
      %13 = vector.load %arg3[%c0_10, %c0_11, %c0_12] : memref<1x128x128xf32, #tpu.memory_space<vmem>>, vector<1x128x128xf32>
      %14 = vector.shape_cast %13 : vector<1x128x128xf32> to vector<128x128xf32>
      %cst_13 = arith.constant dense<0.000000e+00> : vector<8x128xf32>
      %15 = tpu.matmul %12, %14, %cst_13 {dimension_numbers = #tpu.dot_dimension_numbers<[1], [0], [0], [1], [0, 0, 1, 1], [], []>} : vector<8x128xf32>, vector<128x128xf32>, vector<8x128xf32> -> vector<8x128xf32>
      %cst_14 = arith.constant dense<0.000000e+00> : vector<128xf32>
      %16 = vector.multi_reduction <add>, %15, %cst_14 [0] : vector<8x128xf32> to vector<128xf32>
      %17 = vector.shape_cast %16 : vector<128xf32> to vector<1x128xf32>
      %18 = arith.mulf %15, %15 : vector<8x128xf32>
      %cst_15 = arith.constant dense<0.000000e+00> : vector<128xf32>
      %19 = vector.multi_reduction <add>, %18, %cst_15 [0] : vector<8x128xf32> to vector<128xf32>
      %20 = vector.shape_cast %19 : vector<128xf32> to vector<1x128xf32>
      %21 = vector.broadcast %cst : f32 to vector<1x128xf32>
      %22 = arith.mulf %17, %21 : vector<1x128xf32>
      %23 = vector.broadcast %cst : f32 to vector<1x128xf32>
      %24 = arith.mulf %20, %23 : vector<1x128xf32>
      %25 = arith.mulf %22, %22 : vector<1x128xf32>
      %26 = arith.subf %24, %25 : vector<1x128xf32>
      %cst_16 = arith.constant 9.99999974E-6 : f32
      %27 = vector.broadcast %cst_16 : f32 to vector<1x128xf32>
      %28 = arith.addf %26, %27 : vector<1x128xf32>
      %29 = math.rsqrt %28 : vector<1x128xf32>
      %30 = arith.mulf %3, %29 : vector<1x128xf32>
      %31 = arith.mulf %22, %30 : vector<1x128xf32>
      %32 = arith.subf %5, %31 : vector<1x128xf32>
      %33 = vector.broadcast %30 : vector<1x128xf32> to vector<8x128xf32>
      %34 = arith.mulf %15, %33 : vector<8x128xf32>
      %35 = vector.broadcast %32 : vector<1x128xf32> to vector<8x128xf32>
      %36 = arith.addf %34, %35 : vector<8x128xf32>
      %cst_17 = arith.constant 0.000000e+00 : f32
      %37 = vector.broadcast %cst_17 : f32 to vector<8x128xf32>
      %38 = arith.maximumf %36, %37 : vector<8x128xf32>
      %c0_18 = arith.constant 0 : index
      %39 = arith.index_cast %1 : i32 to index
      %40 = vector.load %arg7[%c0_18, %39] : memref<8x128xf32, #tpu.memory_space<vmem>>, vector<8x128xf32>
      tpu.vector_store %arg7[%c0_18, %39], %38 {strides = array<i32>} : memref<8x128xf32, #tpu.memory_space<vmem>>, vector<8x128xf32>,
    } else {
    }
    %c1_i32 = arith.constant 1 : i32
    %9 = arith.cmpi eq, %arg0, %c1_i32 : i32
    %10 = arith.extui %9 : i1 to i32
    %cst_6 = arith.constant 1.250000e-01 : f32
    %c0_i32_7 = arith.constant 0 : i32
    %11 = arith.cmpi ne, %10, %c0_i32_7 : i32
    scf.if %11 {
      %c0_8 = arith.constant 0 : index
      %c0_9 = arith.constant 0 : index
      %12 = vector.load %arg7[%c0_8, %c0_9] : memref<8x128xf32, #tpu.memory_space<vmem>>, vector<8x128xf32>
      %c0_10 = arith.constant 0 : index
      %c0_11 = arith.constant 0 : index
      %c0_12 = arith.constant 0 : index
      %13 = vector.load %arg3[%c0_10, %c0_11, %c0_12] : memref<1x128x128xf32, #tpu.memory_space<vmem>>, vector<1x128x128xf32>
      %14 = vector.shape_cast %13 : vector<1x128x128xf32> to vector<128x128xf32>
      %cst_13 = arith.constant dense<0.000000e+00> : vector<8x128xf32>
      %15 = tpu.matmul %12, %14, %cst_13 {dimension_numbers = #tpu.dot_dimension_numbers<[1], [0], [0], [1], [0, 0, 1, 1], [], []>} : vector<8x128xf32>, vector<128x128xf32>, vector<8x128xf32> -> vector<8x128xf32>
      %cst_14 = arith.constant dense<0.000000e+00> : vector<128xf32>
      %16 = vector.multi_reduction <add>, %15, %cst_14 [0] : vector<8x128xf32> to vector<128xf32>
      %17 = vector.shape_cast %16 : vector<128xf32> to vector<1x128xf32>
      %18 = arith.mulf %15, %15 : vector<8x128xf32>
      %cst_15 = arith.constant dense<0.000000e+00> : vector<128xf32>
      %19 = vector.multi_reduction <add>, %18, %cst_15 [0] : vector<8x128xf32> to vector<128xf32>
      %20 = vector.shape_cast %19 : vector<128xf32> to vector<1x128xf32>
      %21 = vector.broadcast %cst_6 : f32 to vector<1x128xf32>
      %22 = arith.mulf %17, %21 : vector<1x128xf32>
      %23 = vector.broadcast %cst_6 : f32 to vector<1x128xf32>
      %24 = arith.mulf %20, %23 : vector<1x128xf32>
      %25 = arith.mulf %22, %22 : vector<1x128xf32>
      %26 = arith.subf %24, %25 : vector<1x128xf32>
      %cst_16 = arith.constant 9.99999974E-6 : f32
      %27 = vector.broadcast %cst_16 : f32 to vector<1x128xf32>
      %28 = arith.addf %26, %27 : vector<1x128xf32>
      %29 = math.rsqrt %28 : vector<1x128xf32>
      %30 = arith.mulf %3, %29 : vector<1x128xf32>
      %31 = arith.mulf %22, %30 : vector<1x128xf32>
      %32 = arith.subf %5, %31 : vector<1x128xf32>
      %33 = vector.broadcast %30 : vector<1x128xf32> to vector<8x128xf32>
      %34 = arith.mulf %15, %33 : vector<8x128xf32>
      %35 = vector.broadcast %32 : vector<1x128xf32> to vector<8x128xf32>
      %36 = arith.addf %34, %35 : vector<8x128xf32>
      %cst_17 = arith.constant 0.000000e+00 : f32
      %37 = vector.broadcast %cst_17 : f32 to vector<8x128xf32>
      %38 = arith.maximumf %36, %37 : vector<8x128xf32>
      %c0_18 = arith.constant 0 : index
      %39 = arith.index_cast %1 : i32 to index
      %40 = vector.load %arg2[%c0_18, %39] : memref<8x128xf32, #tpu.memory_space<vmem>>, vector<8x128xf32>
      %41 = arith.addf %38, %40 : vector<8x128xf32>
      %c0_19 = arith.constant 0 : index
      %c0_20 = arith.constant 0 : index
      %42 = vector.load %arg6[%c0_19, %c0_20] : memref<8x128xf32, #tpu.memory_space<vmem>>, vector<8x128xf32>
      tpu.vector_store %arg6[%c0_19, %c0_20], %41 {strides = array<i32>} : memref<8x128xf32, #tpu.memory_space<vmem>>, vector<8x128xf32>,
    } else {
    }
    return
  }
  func.func @transform_0(%arg0: i32, %arg1: i32) -> (i32, i32) {
    %c0_i32 = arith.constant 0 : i32
    %c0_i32_0 = arith.constant 0 : i32
    %c0_i32_1 = arith.constant 0 : i32
    return %c0_i32, %c0_i32_0 : i32, i32
  }
  func.func @transform_1(%arg0: i32, %arg1: i32) -> (i32, i32, i32) {
    %c0_i32 = arith.constant 0 : i32
    %c0_i32_0 = arith.constant 0 : i32
    return %arg0, %c0_i32, %arg1 : i32, i32, i32
  }
  func.func @transform_2(%arg0: i32, %arg1: i32) -> (i32, i32, i32) {
    %c0_i32 = arith.constant 0 : i32
    %c0_i32_0 = arith.constant 0 : i32
    return %arg0, %c0_i32, %arg1 : i32, i32, i32
  }
  func.func @transform_3(%arg0: i32, %arg1: i32) -> (i32, i32, i32) {
    %c0_i32 = arith.constant 0 : i32
    %c0_i32_0 = arith.constant 0 : i32
    return %arg0, %c0_i32, %arg1 : i32, i32, i32
  }
  func.func @transform_4(%arg0: i32, %arg1: i32) -> (i32, i32) {
    %c0_i32 = arith.constant 0 : i32
    %c0_i32_0 = arith.constant 0 : i32
    return %c0_i32, %arg1 : i32, i32
  }
}

</mosaic_0001>

<llo_original>
// kernel: tpu_custom_call.1
$region0: #{tpu_custom_call.1}
  #allocation0 [shape = 'u32[]', space=smem, size = 0x4, offset = 0x4, fixed_abs, tag = 'smem constant byte address 0x4 - core index']
  #allocation1 [shape = 'u32[144,128]{1,0:T(1,128)}', space=vmem, size = 0x12000, scoped, tag = 'internal scratch']
  #allocation2 [shape = 'f32[8,128]{1,0:T(8,128)}', space=vmem, size = 0x1000, scoped, tag = 'scratch operand']
  %s0 = inlined_call_operand.hbm [shape: f32[8,128], index: 0, kind: input, shape index: {}, may-alias: {0,4}]
  %s1 = inlined_call_operand.hbm [shape: f32[2,128,128], index: 1, kind: input, shape index: {}]
  %s2 = inlined_call_operand.vmem [shape: f32[2,1,128], index: 2, kind: input, shape index: {}]
  %s3 = inlined_call_operand.vmem [shape: f32[2,1,128], index: 3, kind: input, shape index: {}]
  %s4 = inlined_call_operand.hbm [shape: f32[8,128], index: 4, kind: output, shape index: {}, may-alias: {0,4}]
  %s5 = sld [smem:[#allocation0]]
  $region65: #{tpu_custom_call.1} parent=0
    _
  %s7 = ssub.s32 1, %s5
  %s8 = scalar_select 0, %s7, %s5
  $region1: #{tpu_custom_call.1} parent=0
    #allocation3 [shape = 'u8[4096]{0}', space=vmem, size = 0x1000, scoped, tag = 'input window, operand 0, single buffered']
    #allocation4 [shape = 's32[2]{0}', space=sflag, size = 0x8, scoped, tag = 'scoped memory for tpu_custom_call.1']
    #allocation5 [shape = 's32[2]{0}', space=sflag, size = 0x8, scoped, tag = 'scoped memory for tpu_custom_call.1']
    #allocation6 [shape = 'u8[131072]{0}', space=vmem, size = 0x20000, scoped, tag = 'input window, operand 1']
    #allocation7 [shape = 's32[2]{0}', space=sflag, size = 0x8, scoped, tag = 'scoped memory for tpu_custom_call.1']
    #allocation8 [shape = 'u8[4096]{0}', space=vmem, size = 0x1000, scoped, tag = 'output window, operand 0, single buffered']
    %9 = vsyncpa [#allocation4], 0
    %10 = vsyncpa [#allocation7], 0
    %s11 = scalar_lea.sflag [#allocation7], 1
    %12 = vsyncpa %s11, 0
    %13 = vsyncpa [#allocation5], 0
    loop: start=0, step=1, limit=4
    $region2: #{tpu_custom_call.1} parent=1 // loop_pre_header
      _
    $region3: #{tpu_custom_call.1} parent=1 // loop_header
      %s15 = sphi 0, %s19
      %p16 = scmp.ge.s32.totalorder %s15, 4
      %s22 = sphi 0, %s34
      %s23 = sphi 0, %s30
      %s24 = sphi 0, %s22
      %s25 = sphi 0, %s23
      %s26 = sphi 0, %s24
      %s27 = sphi 0, %s25
      %s35 = sphi 0, %s35
      %s37 = sphi 0, %s35
      %s38 = sphi 0, %s37
      %s52 = sphi 0, %s38
      %s60 = sphi 0, %s62
      %s63 = sphi 0, %s60
      %s64 = sphi 0, %s63
      %s80 = sphi 0, %s64
      %s88 = sphi 0, %s90
      %s91 = sphi 0, %s88
      %s92 = sphi 0, %s91
      %s108 = sphi 0, %s92
      %s116 = sphi 0, %s118
      %s119 = sphi 0, %s116
      %s120 = sphi 0, %s119
      %s136 = sphi 0, %s120
      %s142 = sphi 0, %s144
      %s145 = sphi 0, %s142
      %s146 = sphi 0, %s145
      %s162 = sphi 0, %s146
    $region4: #{tpu_custom_call.1} parent=1 // loop_header_branch
      %18 = sbr.rel (%p16) target = $region8
    $region5: #{tpu_custom_call.1} parent=1 // loop_body
      %s20 = ssub.s32 %s15, 1
      %s21 = ssub.s32 %s15, 2
      %s28 = sadd.s32 1, %s23
      %p29 = scmp.ge.s32.totalorder %s28, 1
      %s30 = scalar_select %p29, 0, %s28
      %s31 = sadd.s32 1, %s22
      %s32 = scalar_select %p29, %s31, %s22
      %p33 = scmp.ge.s32.totalorder %s32, 2
      %s34 = scalar_select %p33, 0, %s32
      %s36 = sadd.s32 %s35, 1
      %p39 = scmp.eq.s32.totalorder %s15, 1
      %p40 = scmp.ne.s32.totalorder %s35, %s37
      %p41 = scmp.eq.s32.totalorder %s15, 0
      %p42 = por %p40, %p41
      %p43 = scmp.ne.s32.totalorder %s35, %s37
      %p44 = scmp.eq.s32.totalorder %s20, 1
      %p45 = por %p43, %p44
      %p46 = scmp.ne.s32.totalorder %s37, %s38
      %p47 = scmp.eq.s32.totalorder %s20, 0
      %p48 = por %p46, %p47
      %p49 = scmp.ne.s32.totalorder %s37, %s38
      %p50 = scmp.eq.s32.totalorder %s21, 1
      %p51 = por %p49, %p50
      %p53 = scmp.ne.s32.totalorder %s38, %s52
      %p54 = scmp.eq.s32.totalorder %s21, 0
      %p55 = por %p53, %p54
      %s56 = ssub.s32 %s22, %s34
      %s57 = ssub.s32 %s23, %s30
      %s58 = sor.u32 %s56, %s57
      %p59 = scmp.eq.s32.totalorder %s58, 0
      %s61 = sadd.s32 %s60, 1
      %s62 = scalar_select %p59, %s60, %s61
      %p65 = pneg %p59
      %p66 = scmp.eq.s32.totalorder %s15, 1
      %p67 = por %p65, %p66
      %p68 = scmp.ne.s32.totalorder %s60, %s63
      %p69 = scmp.eq.s32.totalorder %s15, 0
      %p70 = por %p68, %p69
      %p71 = scmp.ne.s32.totalorder %s60, %s63
      %p72 = scmp.eq.s32.totalorder %s20, 1
      %p73 = por %p71, %p72
      %p74 = scmp.ne.s32.totalorder %s63, %s64
      %p75 = scmp.eq.s32.totalorder %s20, 0
      %p76 = por %p74, %p75
      %p77 = scmp.ne.s32.totalorder %s63, %s64
      %p78 = scmp.eq.s32.totalorder %s21, 1
      %p79 = por %p77, %p78
      %p81 = scmp.ne.s32.totalorder %s64, %s80
      %p82 = scmp.eq.s32.totalorder %s21, 0
      %p83 = por %p81, %p82
      %s84 = ssub.s32 %s22, %s34
      %s85 = ssub.s32 %s23, %s30
      %s86 = sor.u32 %s84, %s85
      %p87 = scmp.eq.s32.totalorder %s86, 0
      %s89 = sadd.s32 %s88, 1
      %s90 = scalar_select %p87, %s88, %s89
      %p93 = pneg %p87
      %p94 = scmp.eq.s32.totalorder %s15, 1
      %p95 = por %p93, %p94
      %p96 = scmp.ne.s32.totalorder %s88, %s91
      %p97 = scmp.eq.s32.totalorder %s15, 0
      %p98 = por %p96, %p97
      %p99 = scmp.ne.s32.totalorder %s88, %s91
      %p100 = scmp.eq.s32.totalorder %s20, 1
      %p101 = por %p99, %p100
      %p102 = scmp.ne.s32.totalorder %s91, %s92
      %p103 = scmp.eq.s32.totalorder %s20, 0
      %p104 = por %p102, %p103
      %p105 = scmp.ne.s32.totalorder %s91, %s92
      %p106 = scmp.eq.s32.totalorder %s21, 1
      %p107 = por %p105, %p106
      %p109 = scmp.ne.s32.totalorder %s92, %s108
      %p110 = scmp.eq.s32.totalorder %s21, 0
      %p111 = por %p109, %p110
      %s112 = ssub.s32 %s22, %s34
      %s113 = ssub.s32 %s23, %s30
      %s114 = sor.u32 %s112, %s113
      %p115 = scmp.eq.s32.totalorder %s114, 0
      %s117 = sadd.s32 %s116, 1
      %s118 = scalar_select %p115, %s116, %s117
      %p121 = pneg %p115
      %p122 = scmp.eq.s32.totalorder %s15, 1
      %p123 = por %p121, %p122
      %p124 = scmp.ne.s32.totalorder %s116, %s119
      %p125 = scmp.eq.s32.totalorder %s15, 0
      %p126 = por %p124, %p125
      %p127 = scmp.ne.s32.totalorder %s116, %s119
      %p128 = scmp.eq.s32.totalorder %s20, 1
      %p129 = por %p127, %p128
      %p130 = scmp.ne.s32.totalorder %s119, %s120
      %p131 = scmp.eq.s32.totalorder %s20, 0
      %p132 = por %p130, %p131
      %p133 = scmp.ne.s32.totalorder %s119, %s120
      %p134 = scmp.eq.s32.totalorder %s21, 1
      %p135 = por %p133, %p134
      %p137 = scmp.ne.s32.totalorder %s120, %s136
      %p138 = scmp.eq.s32.totalorder %s21, 0
      %p139 = por %p137, %p138
      %s140 = ssub.s32 %s23, %s30
      %p141 = scmp.eq.s32.totalorder %s140, 0
      %s143 = sadd.s32 %s142, 1
      %s144 = scalar_select %p141, %s142, %s143
      %p147 = pneg %p141
      %p148 = scmp.eq.s32.totalorder %s15, 1
      %p149 = por %p147, %p148
      %p150 = scmp.ne.s32.totalorder %s142, %s145
      %p151 = scmp.eq.s32.totalorder %s15, 0
      %p152 = por %p150, %p151
      %p153 = scmp.ne.s32.totalorder %s142, %s145
      %p154 = scmp.eq.s32.totalorder %s20, 1
      %p155 = por %p153, %p154
      %p156 = scmp.ne.s32.totalorder %s145, %s146
      %p157 = scmp.eq.s32.totalorder %s20, 0
      %p158 = por %p156, %p157
      %p159 = scmp.ne.s32.totalorder %s145, %s146
      %p160 = scmp.eq.s32.totalorder %s21, 1
      %p161 = por %p159, %p160
      %p163 = scmp.ne.s32.totalorder %s146, %s162
      %p164 = scmp.eq.s32.totalorder %s21, 0
      %p165 = por %p163, %p164
      %p166 = scmp.le.s32.totalorder 1, %s15
      %p167 = scmp.lt.s32.totalorder %s15, 3
      %p168 = pnand %p166, %p167
      %p169 = pneg %p168
      // Predicated region
      $region9: #{tpu_custom_call.1} parent=5 // pred_check
        _
      $region10: #{tpu_custom_call.1} parent=5 // pred_check_branch
        %171 = sbr.rel (%p168) target = $region12
      $region11: #{tpu_custom_call.1} parent=5 // pred_region
        %s172 = ssub.s32 %s15, 1
        // Predicated region
        $region13: #{tpu_custom_call.1} parent=11 // pred_check
          %p173 = pneg %p48
        $region14: #{tpu_custom_call.1} parent=11 // pred_check_branch
          %175 = sbr.rel (%p173) target = $region16
        $region15: #{tpu_custom_call.1} parent=11 // pred_region
          %s177 = ssub.s32 128, 128
          %178 = vsyncadd [#allocation4], %s177
          %s180 = sshll.u32 [#allocation3], 4
          %s181 = int_to_ptr.vmem [resolvable:$true] %s180
          %183 = dma.hbm_to_vmem [thread:$0]  %s0, 128, %s181, [#allocation4]
        $region16: #{tpu_custom_call.1} parent=11 // pred_fallthru
          _
      $region12: #{tpu_custom_call.1} parent=5 // pred_fallthru
        _
      %p184 = scmp.lt.s32.totalorder %s15, 2
      // Predicated region
      $region17: #{tpu_custom_call.1} parent=5 // pred_check
        %p185 = pneg %p184
      $region18: #{tpu_custom_call.1} parent=5 // pred_check_branch
        %187 = sbr.rel (%p185) target = $region20
      $region19: #{tpu_custom_call.1} parent=5 // pred_region
        // Predicated region
        $region21: #{tpu_custom_call.1} parent=19 // pred_check
          %p188 = pneg %p70
        $region22: #{tpu_custom_call.1} parent=19 // pred_check_branch
          %190 = sbr.rel (%p188) target = $region24
        $region23: #{tpu_custom_call.1} parent=19 // pred_region
          %s191 = sand.u32 %s60, 1
          %s192 = scalar_lea.sflag [#allocation7], %s191
          %s193 = sand.u32 %s60, 1
          %s194 = smul.addr %s193, 128
          %s195 = scalar_lea.vmem [#allocation6], %s194
          %s197 = ssub.s32 2048, 2048
          %198 = vsyncadd %s192, %s197
          %s199 = smul.addr %s22, 16
          %s200 = sadd.s32 %s23, %s199
          %s201 = smul.addr %s200, 128
          %s202 = scalar_lea.hbm %s1, %s201
          %s203 = sshll.u32 %s195, 4
          %s204 = int_to_ptr.vmem [resolvable:$true] %s203
          %209 = dma.hbm_to_vmem [thread:$0]  %s202, 2048, %s204, %s192, 128, 128, 8
        $region24: #{tpu_custom_call.1} parent=19 // pred_fallthru
          _
        // Predicated region
        $region25: #{tpu_custom_call.1} parent=19 // pred_check
          %p210 = pneg %p98
        $region26: #{tpu_custom_call.1} parent=19 // pred_check_branch
          %212 = sbr.rel (%p210) target = $region28
        $region27: #{tpu_custom_call.1} parent=19 // pred_region
          %p213 = scmp.lt.s32.totalorder %s22, 1
          %s214 = scalar_select %p213, %s22, 1
          %p215 = scmp.lt.s32.totalorder %s23, 0
          %s216 = scalar_select %p215, %s23, 0
          %s217 = sadd.s32 %s216, %s214
          %s218 = scalar_lea.vmem %s2, %s217
        $region28: #{tpu_custom_call.1} parent=19 // pred_fallthru
          _
        // Predicated region
        $region29: #{tpu_custom_call.1} parent=19 // pred_check
          %p219 = pneg %p126
        $region30: #{tpu_custom_call.1} parent=19 // pred_check_branch
          %221 = sbr.rel (%p219) target = $region32
        $region31: #{tpu_custom_call.1} parent=19 // pred_region
          %p222 = scmp.lt.s32.totalorder %s22, 1
          %s223 = scalar_select %p222, %s22, 1
          %p224 = scmp.lt.s32.totalorder %s23, 0
          %s225 = scalar_select %p224, %s23, 0
          %s226 = sadd.s32 %s225, %s223
          %s227 = scalar_lea.vmem %s3, %s226
        $region32: #{tpu_custom_call.1} parent=19 // pred_fallthru
          _
      $region20: #{tpu_custom_call.1} parent=5 // pred_fallthru
        _
      %p228 = scmp.le.s32.totalorder 1, %s15
      %p229 = scmp.lt.s32.totalorder %s15, 3
      %p230 = pnand %p228, %p229
      %p231 = pneg %p230
      // Predicated region
      $region33: #{tpu_custom_call.1} parent=5 // pred_check
        _
      $region34: #{tpu_custom_call.1} parent=5 // pred_check_branch
        %233 = sbr.rel (%p230) target = $region36
      $region35: #{tpu_custom_call.1} parent=5 // pred_region
        %s234 = ssub.s32 %s15, 1
        // Predicated region
        $region37: #{tpu_custom_call.1} parent=35 // pred_check
          %p235 = pneg %p48
        $region38: #{tpu_custom_call.1} parent=35 // pred_check_branch
          %237 = sbr.rel (%p235) target = $region40
        $region39: #{tpu_custom_call.1} parent=35 // pred_region
          %238 = dma.done [#allocation4], 128
        $region40: #{tpu_custom_call.1} parent=35 // pred_fallthru
          _
        %s239 = sand.u32 %s63, 1
        %s240 = scalar_lea.sflag [#allocation7], %s239
        %s241 = sand.u32 %s63, 1
        %s242 = smul.addr %s241, 128
        %s243 = scalar_lea.vmem [#allocation6], %s242
        // Predicated region
        $region41: #{tpu_custom_call.1} parent=35 // pred_check
          %p244 = pneg %p76
        $region42: #{tpu_custom_call.1} parent=35 // pred_check_branch
          %246 = sbr.rel (%p244) target = $region44
        $region43: #{tpu_custom_call.1} parent=35 // pred_region
          %247 = dma.done %s240, 2048
        $region44: #{tpu_custom_call.1} parent=35 // pred_fallthru
          _
        %p248 = pneg %p48
        %p249 = pneg %p45
        %s250 = sand.u32 %s63, 1
        %s251 = scalar_lea.sflag [#allocation7], %s250
        %s252 = sand.u32 %s63, 1
        %s253 = smul.addr %s252, 128
        %s254 = scalar_lea.vmem [#allocation6], %s253
        %p255 = pneg %p76
        %p256 = pneg %p73
        %p257 = scmp.lt.s32.totalorder %s24, 1
        %s258 = scalar_select %p257, %s24, 1
        %p259 = scmp.lt.s32.totalorder %s25, 0
        %s260 = scalar_select %p259, %s25, 0
        %s261 = sadd.s32 %s260, %s258
        %s262 = scalar_lea.vmem %s2, %s261
        %p263 = pneg %p104
        %p264 = pneg %p101
        %p265 = scmp.lt.s32.totalorder %s24, 1
        %s266 = scalar_select %p265, %s24, 1
        %p267 = scmp.lt.s32.totalorder %s25, 0
        %s268 = scalar_select %p267, %s25, 0
        %s269 = sadd.s32 %s268, %s266
        %s270 = scalar_lea.vmem %s3, %s269
        %p271 = pneg %p132
        %p272 = pneg %p129
        %p273 = pneg %p158
        %p274 = pneg %p155
        %p275 = scmp.lt.s32.totalorder %s24, 1
        %s276 = scalar_select %p275, %s24, 1
        %p277 = scmp.lt.s32.totalorder %s25, 0
        %s278 = scalar_select %p277, %s25, 0
        %s279 = sadd.s32 %s278, %s276
        %s280 = scalar_lea.vmem %s2, %s279
        %p281 = scmp.lt.s32.totalorder %s24, 1
        %s282 = scalar_select %p281, %s24, 1
        %p283 = scmp.lt.s32.totalorder %s25, 0
        %s284 = scalar_select %p283, %s25, 0
        %s285 = sadd.s32 %s284, %s282
        %s286 = scalar_lea.vmem %s3, %s285
        %s287 = smul.u32 %s25, 128
        %v288 = vld [vmem:[%s280] sm:$0x1]
        %v289 = vld [vmem:[%s286] sm:$0x1]
        %p290 = scmp.eq.s32.totalorder %s24, 0
        // Predicated region
        $region45: #{tpu_custom_call.1} parent=35 // pred_check
          %p291 = pneg %p290
        $region46: #{tpu_custom_call.1} parent=35 // pred_check_branch
          %293 = sbr.rel (%p291) target = $region48
        $region47: #{tpu_custom_call.1} parent=35 // pred_region
          %v294 = vld [vmem:[#allocation3] sm:$0xff]
          %v295 = vld [vmem:[%s243] sm:$0xff]
          %v296 = vld [vmem:[%s243 + $0x8] sm:$0xff]
          %v297 = vld [vmem:[%s243 + $0x10] sm:$0xff]
          %v298 = vld [vmem:[%s243 + $0x18] sm:$0xff]
          %v299 = vld [vmem:[%s243 + $0x20] sm:$0xff]
          %v300 = vld [vmem:[%s243 + $0x28] sm:$0xff]
          %v301 = vld [vmem:[%s243 + $0x30] sm:$0xff]
          %v302 = vld [vmem:[%s243 + $0x38] sm:$0xff]
          %v303 = vld [vmem:[%s243 + $0x40] sm:$0xff]
          %v304 = vld [vmem:[%s243 + $0x48] sm:$0xff]
          %v305 = vld [vmem:[%s243 + $0x50] sm:$0xff]
          %v306 = vld [vmem:[%s243 + $0x58] sm:$0xff]
          %v307 = vld [vmem:[%s243 + $0x60] sm:$0xff]
          %v308 = vld [vmem:[%s243 + $0x68] sm:$0xff]
          %v309 = vld [vmem:[%s243 + $0x70] sm:$0xff]
          %v310 = vld [vmem:[%s243 + $0x78] sm:$0xff]
          %311 = vmatprep.subr.mxu0 0.0
          %312 = vmatpush1.msra.mxu0 %v295
          %313 = vmatprep.subr.mxu0 0.0
          %314 = vmatpush1.msra.mxu0 %v296
          %315 = vmatprep.subr.mxu0 0.0
          %316 = vmatpush1.msra.mxu0 %v297
          %317 = vmatprep.subr.mxu0 0.0
          %318 = vmatpush1.msra.mxu0 %v298
          %319 = vmatprep.subr.mxu0 0.0
          %320 = vmatpush1.msra.mxu0 %v299
          %321 = vmatprep.subr.mxu0 0.0
          %322 = vmatpush1.msra.mxu0 %v300
          %323 = vmatprep.subr.mxu0 0.0
          %324 = vmatpush1.msra.mxu0 %v301
          %325 = vmatprep.subr.mxu0 0.0
          %326 = vmatpush1.msra.mxu0 %v302
          %327 = vmatprep.subr.mxu0 0.0
          %328 = vmatpush1.msra.mxu0 %v303
          %329 = vmatprep.subr.mxu0 0.0
          %330 = vmatpush1.msra.mxu0 %v304
          %331 = vmatprep.subr.mxu0 0.0
          %332 = vmatpush1.msra.mxu0 %v305
          %333 = vmatprep.subr.mxu0 0.0
          %334 = vmatpush1.msra.mxu0 %v306
          %335 = vmatprep.subr.mxu0 0.0
          %336 = vmatpush1.msra.mxu0 %v307
          %337 = vmatprep.subr.mxu0 0.0
          %338 = vmatpush1.msra.mxu0 %v308
          %339 = vmatprep.subr.mxu0 0.0
          %340 = vmatpush1.msra.mxu0 %v309
          %341 = vmatprep.subr.mxu0 0.0
          %342 = vmatpush1.msra.mxu0 %v310
          %343 = vmatprep.subr.mxu0 0.0
          %344 = vmatpush1.msra.mxu0 0.0
          %345 = vmatprep.subr.mxu0 0.0
          %346 = vmatpush1.msra.mxu0 0.0
          %347 = vmatprep.subr.mxu0 0.0
          %348 = vmatpush1.msra.mxu0 0.0
          %349 = vmatprep.subr.mxu0 0.0
          %350 = vmatpush1.msra.mxu0 0.0
          %351 = vmatprep.subr.mxu0 0.0
          %352 = vmatpush1.msra.mxu0 0.0
          %353 = vmatprep.subr.mxu0 0.0
          %354 = vmatpush1.msra.mxu0 0.0
          %355 = vmatprep.subr.mxu0 0.0
          %356 = vmatpush1.msra.mxu0 0.0
          %357 = vmatprep.subr.mxu0 0.0
          %358 = vmatpush1.msra.mxu0 0.0
          %359 = vmatprep.subr.mxu0 0.0
          %360 = vmatpush1.msra.mxu0 0.0
          %361 = vmatprep.subr.mxu0 0.0
          %362 = vmatpush1.msra.mxu0 0.0
          %363 = vmatprep.subr.mxu0 0.0
          %364 = vmatpush1.msra.mxu0 0.0
          %365 = vmatprep.subr.mxu0 0.0
          %366 = vmatpush1.msra.mxu0 0.0
          %367 = vmatprep.subr.mxu0 0.0
          %368 = vmatpush1.msra.mxu0 0.0
          %369 = vmatprep.subr.mxu0 0.0
          %370 = vmatpush1.msra.mxu0 0.0
          %371 = vmatprep.subr.mxu0 0.0
          %372 = vmatpush1.msra.mxu0 0.0
          %373 = vmatprep.subr.mxu0 0.0
          %374 = vmatpush1.msra.mxu0 0.0
          %375 = vmatprep.mubr.f32.mxu0 0.0
          %376 = vmatmul.mubr.f32.gmra.mrb[0].mxu0 %v294
          %v377 = vpop.f32.mrb[0].mxu0
          %v378 = vadd.f32 0.0, %v377
          %v379 = vpop.f32.mrb[0].mxu0
          %380 = vdwg.mxu0
          %v381 = vrot.slane %v378, 4
          %v382 = vadd.f32 %v378, %v381
          %v383 = vrot.slane %v382, 2
          %v384 = vadd.f32 %v382, %v383
          %v385 = vrot.slane %v384, 1
          %v386 = vadd.f32 %v384, %v385
          %v387 = vmul.f32 %v378, %v378
          %v388 = vrot.slane %v387, 4
          %v389 = vadd.f32 %v387, %v388
          %v390 = vrot.slane %v389, 2
          %v391 = vadd.f32 %v389, %v390
          %v392 = vrot.slane %v391, 1
          %v393 = vadd.f32 %v391, %v392
          %v394 = vmul.f32 %v386, 0.125
          %v395 = vmul.f32 %v393, 0.125
          %v396 = vmul.f32 %v394, %v394
          %v397 = vsub.f32 %v395, %v396
          %v398 = vadd.f32 %v397, 1e-05
          %v399 = vrsqrt.pop %v398
          %v400 = vmul.f32 %v288, %v399
          %v401 = vmul.f32 %v394, %v400
          %v402 = vsub.f32 %v289, %v401
          %v404 = vlaneseq
          %v405 = vshrl.u32 %v404, 7
          %v406 = vsub.s32 0, %v405
          %v407 = vrot.slane %v400, %v406
          %v409 = vmul.f32 %v378, %v407
          %v411 = vlaneseq
          %v412 = vshrl.u32 %v411, 7
          %v413 = vsub.s32 0, %v412
          %v414 = vrot.slane %v402, %v413
          %v416 = vadd.f32 %v409, %v414
          %v417 = vmax.f32 %v416, 0.0
          %s418 = sshra.s32 %s287, 7
          %s419 = sand.u32 %s287, 127
          %s420 = scalar_lea.vmem [#allocation2], %s418
          %421 = vst [vmem:[%s420] sm:$0xff] %v417
        $region48: #{tpu_custom_call.1} parent=35 // pred_fallthru
          _
        %p422 = scmp.eq.s32.totalorder %s24, 1
        // Predicated region
        $region49: #{tpu_custom_call.1} parent=35 // pred_check
          %p423 = pneg %p422
        $region50: #{tpu_custom_call.1} parent=35 // pred_check_branch
          %425 = sbr.rel (%p423) target = $region52
        $region51: #{tpu_custom_call.1} parent=35 // pred_region
          %v426 = vld [vmem:[#allocation2] sm:$0xff]
          %v427 = vld [vmem:[%s243] sm:$0xff]
          %v428 = vld [vmem:[%s243 + $0x8] sm:$0xff]
          %v429 = vld [vmem:[%s243 + $0x10] sm:$0xff]
          %v430 = vld [vmem:[%s243 + $0x18] sm:$0xff]
          %v431 = vld [vmem:[%s243 + $0x20] sm:$0xff]
          %v432 = vld [vmem:[%s243 + $0x28] sm:$0xff]
          %v433 = vld [vmem:[%s243 + $0x30] sm:$0xff]
          %v434 = vld [vmem:[%s243 + $0x38] sm:$0xff]
          %v435 = vld [vmem:[%s243 + $0x40] sm:$0xff]
          %v436 = vld [vmem:[%s243 + $0x48] sm:$0xff]
          %v437 = vld [vmem:[%s243 + $0x50] sm:$0xff]
          %v438 = vld [vmem:[%s243 + $0x58] sm:$0xff]
          %v439 = vld [vmem:[%s243 + $0x60] sm:$0xff]
          %v440 = vld [vmem:[%s243 + $0x68] sm:$0xff]
          %v441 = vld [vmem:[%s243 + $0x70] sm:$0xff]
          %v442 = vld [vmem:[%s243 + $0x78] sm:$0xff]
          %443 = vmatprep.subr.mxu0 0.0
          %444 = vmatpush1.msra.mxu0 %v427
          %445 = vmatprep.subr.mxu0 0.0
          %446 = vmatpush1.msra.mxu0 %v428
          %447 = vmatprep.subr.mxu0 0.0
          %448 = vmatpush1.msra.mxu0 %v429
          %449 = vmatprep.subr.mxu0 0.0
          %450 = vmatpush1.msra.mxu0 %v430
          %451 = vmatprep.subr.mxu0 0.0
          %452 = vmatpush1.msra.mxu0 %v431
          %453 = vmatprep.subr.mxu0 0.0
          %454 = vmatpush1.msra.mxu0 %v432
          %455 = vmatprep.subr.mxu0 0.0
          %456 = vmatpush1.msra.mxu0 %v433
          %457 = vmatprep.subr.mxu0 0.0
          %458 = vmatpush1.msra.mxu0 %v434
          %459 = vmatprep.subr.mxu0 0.0
          %460 = vmatpush1.msra.mxu0 %v435
          %461 = vmatprep.subr.mxu0 0.0
          %462 = vmatpush1.msra.mxu0 %v436
          %463 = vmatprep.subr.mxu0 0.0
          %464 = vmatpush1.msra.mxu0 %v437
          %465 = vmatprep.subr.mxu0 0.0
          %466 = vmatpush1.msra.mxu0 %v438
          %467 = vmatprep.subr.mxu0 0.0
          %468 = vmatpush1.msra.mxu0 %v439
          %469 = vmatprep.subr.mxu0 0.0
          %470 = vmatpush1.msra.mxu0 %v440
          %471 = vmatprep.subr.mxu0 0.0
          %472 = vmatpush1.msra.mxu0 %v441
          %473 = vmatprep.subr.mxu0 0.0
          %474 = vmatpush1.msra.mxu0 %v442
          %475 = vmatprep.subr.mxu0 0.0
          %476 = vmatpush1.msra.mxu0 0.0
          %477 = vmatprep.subr.mxu0 0.0
          %478 = vmatpush1.msra.mxu0 0.0
          %479 = vmatprep.subr.mxu0 0.0
          %480 = vmatpush1.msra.mxu0 0.0
          %481 = vmatprep.subr.mxu0 0.0
          %482 = vmatpush1.msra.mxu0 0.0
          %483 = vmatprep.subr.mxu0 0.0
          %484 = vmatpush1.msra.mxu0 0.0
          %485 = vmatprep.subr.mxu0 0.0
          %486 = vmatpush1.msra.mxu0 0.0
          %487 = vmatprep.subr.mxu0 0.0
          %488 = vmatpush1.msra.mxu0 0.0
          %489 = vmatprep.subr.mxu0 0.0
          %490 = vmatpush1.msra.mxu0 0.0
          %491 = vmatprep.subr.mxu0 0.0
          %492 = vmatpush1.msra.mxu0 0.0
          %493 = vmatprep.subr.mxu0 0.0
          %494 = vmatpush1.msra.mxu0 0.0
          %495 = vmatprep.subr.mxu0 0.0
          %496 = vmatpush1.msra.mxu0 0.0
          %497 = vmatprep.subr.mxu0 0.0
          %498 = vmatpush1.msra.mxu0 0.0
          %499 = vmatprep.subr.mxu0 0.0
          %500 = vmatpush1.msra.mxu0 0.0
          %501 = vmatprep.subr.mxu0 0.0
          %502 = vmatpush1.msra.mxu0 0.0
          %503 = vmatprep.subr.mxu0 0.0
          %504 = vmatpush1.msra.mxu0 0.0
          %505 = vmatprep.subr.mxu0 0.0
          %506 = vmatpush1.msra.mxu0 0.0
          %507 = vmatprep.mubr.f32.mxu0 0.0
          %508 = vmatmul.mubr.f32.gmra.mrb[0].mxu0 %v426
          %v509 = vpop.f32.mrb[0].mxu0
          %v510 = vadd.f32 0.0, %v509
          %v511 = vpop.f32.mrb[0].mxu0
          %512 = vdwg.mxu0
          %v513 = vrot.slane %v510, 4
          %v514 = vadd.f32 %v510, %v513
          %v515 = vrot.slane %v514, 2
          %v516 = vadd.f32 %v514, %v515
          %v517 = vrot.slane %v516, 1
          %v518 = vadd.f32 %v516, %v517
          %v519 = vmul.f32 %v510, %v510
          %v520 = vrot.slane %v519, 4
          %v521 = vadd.f32 %v519, %v520
          %v522 = vrot.slane %v521, 2
          %v523 = vadd.f32 %v521, %v522
          %v524 = vrot.slane %v523, 1
          %v525 = vadd.f32 %v523, %v524
          %v526 = vmul.f32 %v518, 0.125
          %v527 = vmul.f32 %v525, 0.125
          %v528 = vmul.f32 %v526, %v526
          %v529 = vsub.f32 %v527, %v528
          %v530 = vadd.f32 %v529, 1e-05
          %v531 = vrsqrt.pop %v530
          %v532 = vmul.f32 %v288, %v531
          %v533 = vmul.f32 %v526, %v532
          %v534 = vsub.f32 %v289, %v533
          %v536 = vlaneseq
          %v537 = vshrl.u32 %v536, 7
          %v538 = vsub.s32 0, %v537
          %v539 = vrot.slane %v532, %v538
          %v541 = vmul.f32 %v510, %v539
          %v543 = vlaneseq
          %v544 = vshrl.u32 %v543, 7
          %v545 = vsub.s32 0, %v544
          %v546 = vrot.slane %v534, %v545
          %v548 = vadd.f32 %v541, %v546
          %v549 = vmax.f32 %v548, 0.0
          %s550 = sshra.s32 %s287, 7
          %s551 = sand.u32 %s287, 127
          %s552 = scalar_lea.vmem [#allocation3], %s550
          %v553 = vld [vmem:[%s552] sm:$0xff]
          %v554 = vadd.f32 %v549, %v553
          %555 = vst [vmem:[#allocation8] sm:$0xff] %v554
        $region52: #{tpu_custom_call.1} parent=35 // pred_fallthru
          _
        // Predicated region
        $region53: #{tpu_custom_call.1} parent=35 // pred_check
          %p556 = pneg %p155
        $region54: #{tpu_custom_call.1} parent=35 // pred_check_branch
          %558 = sbr.rel (%p556) target = $region56
        $region55: #{tpu_custom_call.1} parent=35 // pred_region
          %s560 = ssub.s32 128, 128
          %561 = vsyncadd [#allocation5], %s560
          %s562 = smul.addr %s25, 128
          %s563 = scalar_lea.hbm %s4, %s562
          %s565 = sshll.u32 [#allocation8], 4
          %s566 = int_to_ptr.vmem [resolvable:$true] %s565
          %568 = dma.vmem_to_hbm [thread:$0]  %s566, 128, %s563, [#allocation5]
        $region56: #{tpu_custom_call.1} parent=35 // pred_fallthru
          _
        // Predicated region
        $region57: #{tpu_custom_call.1} parent=35 // pred_check
          %p569 = pneg %p155
        $region58: #{tpu_custom_call.1} parent=35 // pred_check_branch
          %571 = sbr.rel (%p569) target = $region60
        $region59: #{tpu_custom_call.1} parent=35 // pred_region
          %572 = dma.done [#allocation5], 128
        $region60: #{tpu_custom_call.1} parent=35 // pred_fallthru
          _
      $region36: #{tpu_custom_call.1} parent=5 // pred_fallthru
        _
      %p573 = scmp.le.s32.totalorder 2, %s15
      // Predicated region
      $region61: #{tpu_custom_call.1} parent=5 // pred_check
        %p574 = pneg %p573
      $region62: #{tpu_custom_call.1} parent=5 // pred_check_branch
        %576 = sbr.rel (%p574) target = $region64
      $region63: #{tpu_custom_call.1} parent=5 // pred_region
        %s577 = ssub.s32 %s15, 2
      $region64: #{tpu_custom_call.1} parent=5 // pred_fallthru
        _
    $region6: #{tpu_custom_call.1} parent=1 // loop_footer
      %s19 = sadd.s32 1, %s15
    $region7: #{tpu_custom_call.1} parent=1 // loop_footer_branch
      %14 = sbr.rel target = $region3
    $region8: #{tpu_custom_call.1} parent=1 // loop_exit
      _
    %578 = vsyncpa [#allocation4], 1
    %s579 = scalar_lea.sflag [#allocation4], 1
    %580 = vsyncpa %s579, 1
    %581 = vsyncpa [#allocation7], 1
    %s582 = scalar_lea.sflag [#allocation7], 1
    %583 = vsyncpa %s582, 1
    %584 = vsyncpa [#allocation5], 1
    %s585 = scalar_lea.sflag [#allocation5], 1
    %586 = vsyncpa %s585, 1

</llo_original>
